<compile_context>
chip_gen: v7x
topology: tpu7x:2x2x1
jax: 0.10.0
libtpu: 0.0.40
codegen_flags: <defaults>
</compile_context>

<pallas_src>
import jax
import jax.numpy as jnp
from jax.experimental import pallas as pl
from jax.experimental.pallas import tpu as pltpu

BATCH = 8
IN_DIM = 16              # = out_dim = h_dim (module asserts in_dim == out_dim)
N_FEAT = 4
C = N_FEAT * IN_DIM      # flat group-major channel count = 64
EPS = 1e-5               # BatchNorm1d default eps


def _res_group_linear_kernel(x_ref, w_ref, bn_ref, o_ref):
    x = x_ref[...].astype(jnp.float32)           # (B, C) lane-dense, read once (aliased with o_ref)
    bn = bn_ref[...].astype(jnp.float32)         # (4, C): gamma1, beta1, gamma2, beta2
    inv_b = jnp.float32(1.0 / x.shape[0])

    def bn_train(t, gamma, beta):
        # single-pass training-mode batch stats: var = E[t^2] - mu^2 (clamped for cancellation safety)
        mu = jnp.sum(t, axis=0, keepdims=True) * inv_b
        msq = jnp.sum(t * t, axis=0, keepdims=True) * inv_b
        var = jnp.maximum(msq - mu * mu, 0.0)
        scale = gamma * jax.lax.rsqrt(var + EPS)   # fused per-channel scale
        shift = beta - mu * scale                  # fused per-channel shift
        return t * scale + shift

    # GroupLinear #1 as one block-diagonal MXU matmul (conv bias dropped: cancels under training BN)
    h = jnp.dot(x, w_ref[0], preferred_element_type=jnp.float32)
    h = bn_train(h, bn[0:1, :], bn[1:2, :])
    h = jnp.maximum(h, 0.0)                      # ReLU

    # GroupLinear #2 + BN #2
    y = jnp.dot(h, w_ref[1], preferred_element_type=jnp.float32)
    y = bn_train(y, bn[2:3, :], bn[3:4, :])

    # residual — single lane-dense store
    o_ref[...] = (x + y).astype(o_ref.dtype)


def res_group_linear(x, w_bd, bn):
    """x: (B, n_features*in_dim) f32 (group-major flat channels) -> same shape."""
    B, Cx = x.shape
    assert Cx == C, (Cx, C)
    vmem = pl.BlockSpec(memory_space=pltpu.MemorySpace.VMEM)
    return pl.pallas_call(
        _res_group_linear_kernel,
        out_shape=jax.ShapeDtypeStruct((B, C), jnp.float32),
        in_specs=[vmem, vmem, vmem],
        out_specs=vmem,
        input_output_aliases={0: 0},             # output reuses x's buffer (same shape/dtype)
    )(x, w_bd, bn)


# ---------------- parameter construction / packing ----------------

def make_raw_params(key):
    """Per-group parameters in the PyTorch layout (grouped conv weight (G, O, I), etc.)."""
    ks = jax.random.split(key, 8)
    f32 = jnp.float32
    return {
        'w1': 0.1 * jax.random.normal(ks[0], (N_FEAT, IN_DIM, IN_DIM), f32),
        'w2': 0.1 * jax.random.normal(ks[1], (N_FEAT, IN_DIM, IN_DIM), f32),
        # GroupLinear biases (trunc_normal std=0.1 in torch; plain normal*0.1 here — test-only diff)
        'b1': 0.1 * jax.random.normal(ks[2], (N_FEAT, IN_DIM), f32),
        'b2': 0.1 * jax.random.normal(ks[3], (N_FEAT, IN_DIM), f32),
        # BatchNorm1d affine params per flat channel, viewed as (G, O)
        'g1': 1.0 + 0.1 * jax.random.normal(ks[4], (N_FEAT, IN_DIM), f32),
        'be1': 0.1 * jax.random.normal(ks[5], (N_FEAT, IN_DIM), f32),
        'g2': 1.0 + 0.1 * jax.random.normal(ks[6], (N_FEAT, IN_DIM), f32),
        'be2': 0.1 * jax.random.normal(ks[7], (N_FEAT, IN_DIM), f32),
    }


def pack_params(raw):
    """One-time layout transform: block-diagonal weights + packed BN slab (done outside the kernel)."""
    def block_diag_t(w):                          # (G, O, I) -> (G*I, G*O), w[g].T on the diagonal
        G, O, I = w.shape
        bd = jnp.zeros((G * I, G * O), w.dtype)
        for g in range(G):
            bd = bd.at[g * I:(g + 1) * I, g * O:(g + 1) * O].set(w[g].T)
        return bd

    w_bd = jnp.stack([block_diag_t(raw['w1']), block_diag_t(raw['w2'])])   # (2, C, C)
    bn = jnp.stack([raw['g1'].reshape(-1), raw['be1'].reshape(-1),
                    raw['g2'].reshape(-1), raw['be2'].reshape(-1)])        # (4, C)
    return w_bd, bn


# ---------------- pure-JAX reference (faithful PyTorch training-mode semantics) ----------------

def res_group_linear_ref(x, raw):
    B = x.shape[0]
    x3 = x.reshape(B, N_FEAT, IN_DIM).astype(jnp.float32)

    h = jnp.einsum('bgi,goi->bgo', x3, raw['w1']) + raw['b1'][None]
    mu = h.mean(0, keepdims=True)
    var = ((h - mu) ** 2).mean(0, keepdims=True)
    h = (h - mu) / jnp.sqrt(var + EPS) * raw['g1'][None] + raw['be1'][None]
    h = jnp.maximum(h, 0.0)

    y = jnp.einsum('bgo,gpo->bgp', h, raw['w2']) + raw['b2'][None]
    mu2 = y.mean(0, keepdims=True)
    var2 = ((y - mu2) ** 2).mean(0, keepdims=True)
    y = (y - mu2) / jnp.sqrt(var2 + EPS) * raw['g2'][None] + raw['be2'][None]

    return (x3 + y).reshape(B, N_FEAT * IN_DIM)


if __name__ == "__main__":
    key = jax.random.PRNGKey(0)
    kx, kp = jax.random.split(key)
    x = jax.random.normal(kx, (BATCH, C), jnp.float32)
    raw = make_raw_params(kp)
    w_bd, bn = pack_params(raw)

    ref = res_group_linear_ref(x, raw)            # computed before the kernel (x buffer is aliased)
    out = jax.block_until_ready(res_group_linear(x, w_bd, bn))

    assert out.shape == (BATCH, C), out.shape
    assert jnp.allclose(out, ref, atol=1e-4, rtol=1e-4), float(jnp.max(jnp.abs(out - ref)))
    print("KERNEL_OK")
</pallas_src>

<mosaic_0001>
module attributes {stable_mosaic.version = 11 : i64} {
  func.func @_res_group_linear_kernel(%arg0: memref<8x64xf32, #tpu.memory_space<vmem>>, %arg1: memref<2x64x64xf32, #tpu.memory_space<vmem>>, %arg2: memref<4x64xf32, #tpu.memory_space<vmem>>, %arg3: memref<8x64xf32, #tpu.memory_space<vmem>>) attributes {dimension_semantics = [], scalar_prefetch = 0 : i64, scratch_operands = 0 : i64, tpu.core_type = #tpu.core_type<tc>} {
    %c0 = arith.constant 0 : index
    %c0_0 = arith.constant 0 : index
    %0 = vector.load %arg0[%c0, %c0_0] : memref<8x64xf32, #tpu.memory_space<vmem>>, vector<8x64xf32>
    %c0_1 = arith.constant 0 : index
    %c0_2 = arith.constant 0 : index
    %1 = vector.load %arg2[%c0_1, %c0_2] : memref<4x64xf32, #tpu.memory_space<vmem>>, vector<4x64xf32>
    %c0_3 = arith.constant 0 : index
    %c0_4 = arith.constant 0 : index
    %c0_5 = arith.constant 0 : index
    %2 = vector.load %arg1[%c0_3, %c0_4, %c0_5] : memref<2x64x64xf32, #tpu.memory_space<vmem>>, vector<1x64x64xf32>
    %3 = vector.shape_cast %2 : vector<1x64x64xf32> to vector<64x64xf32>
    %cst = arith.constant dense<0.000000e+00> : vector<8x64xf32>
    %4 = tpu.matmul %0, %3, %cst {dimension_numbers = #tpu.dot_dimension_numbers<[1], [0], [0], [1], [0, 0, 1, 1], [], []>} : vector<8x64xf32>, vector<64x64xf32>, vector<8x64xf32> -> vector<8x64xf32>
    %5 = vector.extract_strided_slice %1 {offsets = [0, 0], sizes = [1, 64], strides = [1, 1]} : vector<4x64xf32> to vector<1x64xf32>
    %6 = vector.extract_strided_slice %1 {offsets = [1, 0], sizes = [1, 64], strides = [1, 1]} : vector<4x64xf32> to vector<1x64xf32>
    %cst_6 = arith.constant dense<0.000000e+00> : vector<64xf32>
    %7 = vector.multi_reduction <add>, %4, %cst_6 [0] : vector<8x64xf32> to vector<64xf32>
    %8 = vector.shape_cast %7 : vector<64xf32> to vector<1x64xf32>
    %cst_7 = arith.constant 1.250000e-01 : f32
    %9 = vector.broadcast %cst_7 : f32 to vector<1x64xf32>
    %10 = arith.mulf %8, %9 : vector<1x64xf32>
    %11 = arith.mulf %4, %4 : vector<8x64xf32>
    %cst_8 = arith.constant dense<0.000000e+00> : vector<64xf32>
    %12 = vector.multi_reduction <add>, %11, %cst_8 [0] : vector<8x64xf32> to vector<64xf32>
    %13 = vector.shape_cast %12 : vector<64xf32> to vector<1x64xf32>
    %cst_9 = arith.constant 1.250000e-01 : f32
    %14 = vector.broadcast %cst_9 : f32 to vector<1x64xf32>
    %15 = arith.mulf %13, %14 : vector<1x64xf32>
    %16 = arith.mulf %10, %10 : vector<1x64xf32>
    %17 = arith.subf %15, %16 : vector<1x64xf32>
    %cst_10 = arith.constant 0.000000e+00 : f32
    %18 = vector.broadcast %cst_10 : f32 to vector<1x64xf32>
    %19 = arith.maximumf %17, %18 : vector<1x64xf32>
    %cst_11 = arith.constant 9.99999974E-6 : f32
    %20 = vector.broadcast %cst_11 : f32 to vector<1x64xf32>
    %21 = arith.addf %19, %20 : vector<1x64xf32>
    %22 = math.rsqrt %21 : vector<1x64xf32>
    %23 = arith.mulf %5, %22 : vector<1x64xf32>
    %24 = arith.mulf %10, %23 : vector<1x64xf32>
    %25 = arith.subf %6, %24 : vector<1x64xf32>
    %26 = vector.broadcast %23 : vector<1x64xf32> to vector<8x64xf32>
    %27 = arith.mulf %4, %26 : vector<8x64xf32>
    %28 = vector.broadcast %25 : vector<1x64xf32> to vector<8x64xf32>
    %29 = arith.addf %27, %28 : vector<8x64xf32>
    %cst_12 = arith.constant 0.000000e+00 : f32
    %30 = vector.broadcast %cst_12 : f32 to vector<8x64xf32>
    %31 = arith.maximumf %29, %30 : vector<8x64xf32>
    %c1 = arith.constant 1 : index
    %c0_13 = arith.constant 0 : index
    %c0_14 = arith.constant 0 : index
    %32 = vector.load %arg1[%c1, %c0_13, %c0_14] : memref<2x64x64xf32, #tpu.memory_space<vmem>>, vector<1x64x64xf32>
    %33 = vector.shape_cast %32 : vector<1x64x64xf32> to vector<64x64xf32>
    %cst_15 = arith.constant dense<0.000000e+00> : vector<8x64xf32>
    %34 = tpu.matmul %31, %33, %cst_15 {dimension_numbers = #tpu.dot_dimension_numbers<[1], [0], [0], [1], [0, 0, 1, 1], [], []>} : vector<8x64xf32>, vector<64x64xf32>, vector<8x64xf32> -> vector<8x64xf32>
    %35 = vector.extract_strided_slice %1 {offsets = [2, 0], sizes = [1, 64], strides = [1, 1]} : vector<4x64xf32> to vector<1x64xf32>
    %36 = vector.extract_strided_slice %1 {offsets = [3, 0], sizes = [1, 64], strides = [1, 1]} : vector<4x64xf32> to vector<1x64xf32>
    %cst_16 = arith.constant dense<0.000000e+00> : vector<64xf32>
    %37 = vector.multi_reduction <add>, %34, %cst_16 [0] : vector<8x64xf32> to vector<64xf32>
    %38 = vector.shape_cast %37 : vector<64xf32> to vector<1x64xf32>
    %cst_17 = arith.constant 1.250000e-01 : f32
    %39 = vector.broadcast %cst_17 : f32 to vector<1x64xf32>
    %40 = arith.mulf %38, %39 : vector<1x64xf32>
    %41 = arith.mulf %34, %34 : vector<8x64xf32>
    %cst_18 = arith.constant dense<0.000000e+00> : vector<64xf32>
    %42 = vector.multi_reduction <add>, %41, %cst_18 [0] : vector<8x64xf32> to vector<64xf32>
    %43 = vector.shape_cast %42 : vector<64xf32> to vector<1x64xf32>
    %cst_19 = arith.constant 1.250000e-01 : f32
    %44 = vector.broadcast %cst_19 : f32 to vector<1x64xf32>
    %45 = arith.mulf %43, %44 : vector<1x64xf32>
    %46 = arith.mulf %40, %40 : vector<1x64xf32>
    %47 = arith.subf %45, %46 : vector<1x64xf32>
    %cst_20 = arith.constant 0.000000e+00 : f32
    %48 = vector.broadcast %cst_20 : f32 to vector<1x64xf32>
    %49 = arith.maximumf %47, %48 : vector<1x64xf32>
    %cst_21 = arith.constant 9.99999974E-6 : f32
    %50 = vector.broadcast %cst_21 : f32 to vector<1x64xf32>
    %51 = arith.addf %49, %50 : vector<1x64xf32>
    %52 = math.rsqrt %51 : vector<1x64xf32>
    %53 = arith.mulf %35, %52 : vector<1x64xf32>
    %54 = arith.mulf %40, %53 : vector<1x64xf32>
    %55 = arith.subf %36, %54 : vector<1x64xf32>
    %56 = vector.broadcast %53 : vector<1x64xf32> to vector<8x64xf32>
    %57 = arith.mulf %34, %56 : vector<8x64xf32>
    %58 = vector.broadcast %55 : vector<1x64xf32> to vector<8x64xf32>
    %59 = arith.addf %57, %58 : vector<8x64xf32>
    %60 = arith.addf %0, %59 : vector<8x64xf32>
    %c0_22 = arith.constant 0 : index
    %c0_23 = arith.constant 0 : index
    %61 = vector.load %arg3[%c0_22, %c0_23] : memref<8x64xf32, #tpu.memory_space<vmem>>, vector<8x64xf32>
    tpu.vector_store %arg3[%c0_22, %c0_23], %60 {strides = array<i32>} : memref<8x64xf32, #tpu.memory_space<vmem>>, vector<8x64xf32>,
    return
  }
}

</mosaic_0001>

<llo_original>
// kernel: tpu_custom_call.1
$region0: #{tpu_custom_call.1}
  #allocation0 [shape = 'u32[]', space=smem, size = 0x4, offset = 0x4, fixed_abs, tag = 'smem constant byte address 0x4 - core index']
  #allocation1 [shape = 'u32[144,128]{1,0:T(1,128)}', space=vmem, size = 0x12000, scoped, tag = 'internal scratch']
  %s0 = inlined_call_operand.hbm [shape: f32[8,64], index: 0, kind: input, shape index: {}, may-alias: {0,3}]
  %s1 = inlined_call_operand.hbm [shape: f32[2,64,64], index: 1, kind: input, shape index: {}]
  %s2 = inlined_call_operand.vmem [shape: f32[4,64], index: 2, kind: input, shape index: {}]
  %s3 = inlined_call_operand.hbm [shape: f32[8,64], index: 3, kind: output, shape index: {}, may-alias: {0,3}]
  %s4 = sld [smem:[#allocation0]]
  $region30: #{tpu_custom_call.1} parent=0
    _
  %s6 = ssub.s32 1, %s4
  %s7 = scalar_select 0, %s6, %s4
  $region1: #{tpu_custom_call.1} parent=0
    #allocation2 [shape = 'u8[4096]{0}', space=vmem, size = 0x1000, scoped, tag = 'input window, operand 0, single buffered']
    #allocation3 [shape = 's32[1]{0}', space=sflag, size = 0x4, scoped, tag = 'scoped memory for tpu_custom_call.1']
    #allocation4 [shape = 's32[1]{0}', space=sflag, size = 0x4, scoped, tag = 'scoped memory for tpu_custom_call.1']
    #allocation5 [shape = 'u8[65536]{0}', space=vmem, size = 0x10000, scoped, tag = 'input window, operand 1, single buffered']
    #allocation6 [shape = 's32[1]{0}', space=sflag, size = 0x4, scoped, tag = 'scoped memory for tpu_custom_call.1']
    #allocation7 [shape = 'u8[4096]{0}', space=vmem, size = 0x1000, scoped, tag = 'output window, operand 0, single buffered']
    %8 = vsyncpa [#allocation3], 0
    %9 = vsyncpa [#allocation6], 0
    %10 = vsyncpa [#allocation4], 0
    // Predicated region
    $region2: #{tpu_custom_call.1} parent=1 // pred_check
      _
    $region3: #{tpu_custom_call.1} parent=1 // pred_check_branch
      %12 = sbr.rel (0) target = $region5
    $region4: #{tpu_custom_call.1} parent=1 // pred_region
      %s14 = ssub.s32 128, 128
      %15 = vsyncadd [#allocation3], %s14
      %s17 = sshll.u32 [#allocation2], 4
      %s18 = int_to_ptr.vmem [resolvable:$true] %s17
      %20 = dma.hbm_to_vmem [thread:$0]  %s0, 128, %s18, [#allocation3]
    $region5: #{tpu_custom_call.1} parent=1 // pred_fallthru
      _
    // Predicated region
    $region6: #{tpu_custom_call.1} parent=1 // pred_check
      _
    $region7: #{tpu_custom_call.1} parent=1 // pred_check_branch
      %22 = sbr.rel (0) target = $region9
    $region8: #{tpu_custom_call.1} parent=1 // pred_region
      %s24 = ssub.s32 2048, 2048
      %25 = vsyncadd [#allocation6], %s24
      %s26 = sshll.u32 [#allocation5], 4
      %s27 = int_to_ptr.vmem [resolvable:$true] %s26
      %32 = dma.hbm_to_vmem [thread:$0]  %s1, 2048, %s27, [#allocation6], 128, 128, 8
    $region9: #{tpu_custom_call.1} parent=1 // pred_fallthru
      _
    // Predicated region
    $region10: #{tpu_custom_call.1} parent=1 // pred_check
      _
    $region11: #{tpu_custom_call.1} parent=1 // pred_check_branch
      %34 = sbr.rel (0) target = $region13
    $region12: #{tpu_custom_call.1} parent=1 // pred_region
      _
    $region13: #{tpu_custom_call.1} parent=1 // pred_fallthru
      _
    // Predicated region
    $region14: #{tpu_custom_call.1} parent=1 // pred_check
      _
    $region15: #{tpu_custom_call.1} parent=1 // pred_check_branch
      %36 = sbr.rel (0) target = $region17
    $region16: #{tpu_custom_call.1} parent=1 // pred_region
      %37 = dma.done [#allocation3], 128
    $region17: #{tpu_custom_call.1} parent=1 // pred_fallthru
      _
    // Predicated region
    $region18: #{tpu_custom_call.1} parent=1 // pred_check
      _
    $region19: #{tpu_custom_call.1} parent=1 // pred_check_branch
      %39 = sbr.rel (0) target = $region21
    $region20: #{tpu_custom_call.1} parent=1 // pred_region
      %40 = dma.done [#allocation6], 2048
    $region21: #{tpu_custom_call.1} parent=1 // pred_fallthru
      _
    %v41 = vld [vmem:[#allocation2] sm:$0xff]
    %v42 = vld [vmem:[%s2] sm:$0xf]
    %v43 = vld [vmem:[#allocation5] sm:$0xff]
    %v44 = vld [vmem:[#allocation5 + $0x8] sm:$0xff]
    %v45 = vld [vmem:[#allocation5 + $0x10] sm:$0xff]
    %v46 = vld [vmem:[#allocation5 + $0x18] sm:$0xff]
    %v47 = vld [vmem:[#allocation5 + $0x20] sm:$0xff]
    %v48 = vld [vmem:[#allocation5 + $0x28] sm:$0xff]
    %v49 = vld [vmem:[#allocation5 + $0x30] sm:$0xff]
    %v50 = vld [vmem:[#allocation5 + $0x38] sm:$0xff]
    %vm51 = vcmask 523264
    %v53 = vsel %vm51, %v41, 0
    %55 = vmatprep.subr.mxu0 0.0
    %56 = vmatpush1.msra.mxu0 %v43
    %57 = vmatprep.subr.mxu0 0.0
    %58 = vmatpush1.msra.mxu0 %v44
    %59 = vmatprep.subr.mxu0 0.0
    %60 = vmatpush1.msra.mxu0 %v45
    %61 = vmatprep.subr.mxu0 0.0
    %62 = vmatpush1.msra.mxu0 %v46
    %63 = vmatprep.subr.mxu0 0.0
    %64 = vmatpush1.msra.mxu0 %v47
    %65 = vmatprep.subr.mxu0 0.0
    %66 = vmatpush1.msra.mxu0 %v48
    %67 = vmatprep.subr.mxu0 0.0
    %68 = vmatpush1.msra.mxu0 %v49
    %69 = vmatprep.subr.mxu0 0.0
    %70 = vmatpush1.msra.mxu0 %v50
    %71 = vmatprep.subr.mxu0 0.0
    %72 = vmatpush1.msra.mxu0 0.0
    %73 = vmatprep.subr.mxu0 0.0
    %74 = vmatpush1.msra.mxu0 0.0
    %75 = vmatprep.subr.mxu0 0.0
    %76 = vmatpush1.msra.mxu0 0.0
    %77 = vmatprep.subr.mxu0 0.0
    %78 = vmatpush1.msra.mxu0 0.0
    %79 = vmatprep.subr.mxu0 0.0
    %80 = vmatpush1.msra.mxu0 0.0
    %81 = vmatprep.subr.mxu0 0.0
    %82 = vmatpush1.msra.mxu0 0.0
    %83 = vmatprep.subr.mxu0 0.0
    %84 = vmatpush1.msra.mxu0 0.0
    %85 = vmatprep.subr.mxu0 0.0
    %86 = vmatpush1.msra.mxu0 0.0
    %87 = vmatprep.subr.mxu0 0.0
    %88 = vmatpush1.msra.mxu0 0.0
    %89 = vmatprep.subr.mxu0 0.0
    %90 = vmatpush1.msra.mxu0 0.0
    %91 = vmatprep.subr.mxu0 0.0
    %92 = vmatpush1.msra.mxu0 0.0
    %93 = vmatprep.subr.mxu0 0.0
    %94 = vmatpush1.msra.mxu0 0.0
    %95 = vmatprep.subr.mxu0 0.0
    %96 = vmatpush1.msra.mxu0 0.0
    %97 = vmatprep.subr.mxu0 0.0
    %98 = vmatpush1.msra.mxu0 0.0
    %99 = vmatprep.subr.mxu0 0.0
    %100 = vmatpush1.msra.mxu0 0.0
    %101 = vmatprep.subr.mxu0 0.0
    %102 = vmatpush1.msra.mxu0 0.0
    %103 = vmatprep.subr.mxu0 0.0
    %104 = vmatpush1.msra.mxu0 0.0
    %105 = vmatprep.subr.mxu0 0.0
    %106 = vmatpush1.msra.mxu0 0.0
    %107 = vmatprep.subr.mxu0 0.0
    %108 = vmatpush1.msra.mxu0 0.0
    %109 = vmatprep.subr.mxu0 0.0
    %110 = vmatpush1.msra.mxu0 0.0
    %111 = vmatprep.subr.mxu0 0.0
    %112 = vmatpush1.msra.mxu0 0.0
    %113 = vmatprep.subr.mxu0 0.0
    %114 = vmatpush1.msra.mxu0 0.0
    %115 = vmatprep.subr.mxu0 0.0
    %116 = vmatpush1.msra.mxu0 0.0
    %117 = vmatprep.subr.mxu0 0.0
    %118 = vmatpush1.msra.mxu0 0.0
    %119 = vmatprep.mubr.f32.mxu0 0.0
    %120 = vmatmul.mubr.f32.gmra.mrb[0].mxu0 %v53
    %v121 = vpop.f32.mrb[0].mxu0
    %v122 = vadd.f32 0.0, %v121
    %v123 = vpop.f32.mrb[0].mxu0
    %124 = vdwg.mxu0
    %v125 = vsel %vm51, %v122, 0.0
    %v126 = vrot.slane %v125, 4
    %v127 = vadd.f32 %v125, %v126
    %v128 = vrot.slane %v127, 2
    %v129 = vadd.f32 %v127, %v128
    %v130 = vrot.slane %v129, 1
    %v131 = vadd.f32 %v129, %v130
    %v132 = vmul.f32 %v131, 0.125
    %v133 = vmul.f32 %v122, %v122
    %v134 = vsel %vm51, %v133, 0.0
    %v135 = vrot.slane %v134, 4
    %v136 = vadd.f32 %v134, %v135
    %v137 = vrot.slane %v136, 2
    %v138 = vadd.f32 %v136, %v137
    %v139 = vrot.slane %v138, 1
    %v140 = vadd.f32 %v138, %v139
    %v141 = vmul.f32 %v140, 0.125
    %v142 = vmul.f32 %v132, %v132
    %v143 = vsub.f32 %v141, %v142
    %v144 = vmax.f32 %v143, 0.0
    %v145 = vadd.f32 %v144, 1e-05
    %v146 = vrsqrt.pop %v145
    %v147 = vmul.f32 %v42, %v146
    %v148 = vmul.f32 %v132, %v147
    %v150 = vrot.slane %v148, 7
    %v152 = vsub.f32 %v42, %v150
    %v153 = vlaneseq
    %v154 = vshrl.u32 %v153, 7
    %v155 = vsub.s32 0, %v154
    %v156 = vrot.slane %v147, %v155
    %v157 = vmul.f32 %v122, %v156
    %v158 = vlaneseq
    %v159 = vshrl.u32 %v158, 7
    %v160 = vsub.s32 1, %v159
    %v161 = vrot.slane %v152, %v160
    %v162 = vadd.f32 %v157, %v161
    %v163 = vmax.f32 %v162, 0.0
    %s164 = scalar_lea.vmem [#allocation5], 64
    %v165 = vld [vmem:[%s164] sm:$0xff]
    %v166 = vld [vmem:[%s164 + $0x8] sm:$0xff]
    %v167 = vld [vmem:[%s164 + $0x10] sm:$0xff]
    %v168 = vld [vmem:[%s164 + $0x18] sm:$0xff]
    %v169 = vld [vmem:[%s164 + $0x20] sm:$0xff]
    %v170 = vld [vmem:[%s164 + $0x28] sm:$0xff]
    %v171 = vld [vmem:[%s164 + $0x30] sm:$0xff]
    %v172 = vld [vmem:[%s164 + $0x38] sm:$0xff]
    %v174 = vsel %vm51, %v163, 0
    %176 = vmatprep.subr.mxu0 0.0
    %177 = vmatpush1.msra.mxu0 %v165
    %178 = vmatprep.subr.mxu0 0.0
    %179 = vmatpush1.msra.mxu0 %v166
    %180 = vmatprep.subr.mxu0 0.0
    %181 = vmatpush1.msra.mxu0 %v167
    %182 = vmatprep.subr.mxu0 0.0
    %183 = vmatpush1.msra.mxu0 %v168
    %184 = vmatprep.subr.mxu0 0.0
    %185 = vmatpush1.msra.mxu0 %v169
    %186 = vmatprep.subr.mxu0 0.0
    %187 = vmatpush1.msra.mxu0 %v170
    %188 = vmatprep.subr.mxu0 0.0
    %189 = vmatpush1.msra.mxu0 %v171
    %190 = vmatprep.subr.mxu0 0.0
    %191 = vmatpush1.msra.mxu0 %v172
    %192 = vmatprep.subr.mxu0 0.0
    %193 = vmatpush1.msra.mxu0 0.0
    %194 = vmatprep.subr.mxu0 0.0
    %195 = vmatpush1.msra.mxu0 0.0
    %196 = vmatprep.subr.mxu0 0.0
    %197 = vmatpush1.msra.mxu0 0.0
    %198 = vmatprep.subr.mxu0 0.0
    %199 = vmatpush1.msra.mxu0 0.0
    %200 = vmatprep.subr.mxu0 0.0
    %201 = vmatpush1.msra.mxu0 0.0
    %202 = vmatprep.subr.mxu0 0.0
    %203 = vmatpush1.msra.mxu0 0.0
    %204 = vmatprep.subr.mxu0 0.0
    %205 = vmatpush1.msra.mxu0 0.0
    %206 = vmatprep.subr.mxu0 0.0
    %207 = vmatpush1.msra.mxu0 0.0
    %208 = vmatprep.subr.mxu0 0.0
    %209 = vmatpush1.msra.mxu0 0.0
    %210 = vmatprep.subr.mxu0 0.0
    %211 = vmatpush1.msra.mxu0 0.0
    %212 = vmatprep.subr.mxu0 0.0
    %213 = vmatpush1.msra.mxu0 0.0
    %214 = vmatprep.subr.mxu0 0.0
    %215 = vmatpush1.msra.mxu0 0.0
    %216 = vmatprep.subr.mxu0 0.0
    %217 = vmatpush1.msra.mxu0 0.0
    %218 = vmatprep.subr.mxu0 0.0
    %219 = vmatpush1.msra.mxu0 0.0
    %220 = vmatprep.subr.mxu0 0.0
    %221 = vmatpush1.msra.mxu0 0.0
    %222 = vmatprep.subr.mxu0 0.0
    %223 = vmatpush1.msra.mxu0 0.0
    %224 = vmatprep.subr.mxu0 0.0
    %225 = vmatpush1.msra.mxu0 0.0
    %226 = vmatprep.subr.mxu0 0.0
    %227 = vmatpush1.msra.mxu0 0.0
    %228 = vmatprep.subr.mxu0 0.0
    %229 = vmatpush1.msra.mxu0 0.0
    %230 = vmatprep.subr.mxu0 0.0
    %231 = vmatpush1.msra.mxu0 0.0
    %232 = vmatprep.subr.mxu0 0.0
    %233 = vmatpush1.msra.mxu0 0.0
    %234 = vmatprep.subr.mxu0 0.0
    %235 = vmatpush1.msra.mxu0 0.0
    %236 = vmatprep.subr.mxu0 0.0
    %237 = vmatpush1.msra.mxu0 0.0
    %238 = vmatprep.subr.mxu0 0.0
    %239 = vmatpush1.msra.mxu0 0.0
    %240 = vmatprep.mubr.f32.mxu0 0.0
    %241 = vmatmul.mubr.f32.gmra.mrb[0].mxu0 %v174
    %v242 = vpop.f32.mrb[0].mxu0
    %v243 = vadd.f32 0.0, %v242
    %v244 = vpop.f32.mrb[0].mxu0
    %245 = vdwg.mxu0
    %v246 = vsel %vm51, %v243, 0.0
    %v247 = vrot.slane %v246, 4
    %v248 = vadd.f32 %v246, %v247
    %v249 = vrot.slane %v248, 2
    %v250 = vadd.f32 %v248, %v249
    %v251 = vrot.slane %v250, 1
    %v252 = vadd.f32 %v250, %v251
    %v253 = vmul.f32 %v252, 0.125
    %v254 = vmul.f32 %v243, %v243
    %v255 = vsel %vm51, %v254, 0.0
    %v256 = vrot.slane %v255, 4
    %v257 = vadd.f32 %v255, %v256
    %v258 = vrot.slane %v257, 2
    %v259 = vadd.f32 %v257, %v258
    %v260 = vrot.slane %v259, 1
    %v261 = vadd.f32 %v259, %v260
    %v262 = vmul.f32 %v261, 0.125
    %v263 = vmul.f32 %v253, %v253
    %v264 = vsub.f32 %v262, %v263
    %v265 = vmax.f32 %v264, 0.0
    %v266 = vadd.f32 %v265, 1e-05
    %v267 = vrsqrt.pop %v266
    %v268 = vmul.f32 %v42, %v267
    %v269 = vmul.f32 %v253, %v268
    %v271 = vrot.slane %v269, 7
    %v273 = vsub.f32 %v42, %v271
    %v274 = vlaneseq
    %v275 = vshrl.u32 %v274, 7
    %v276 = vsub.s32 2, %v275
    %v277 = vrot.slane %v268, %v276
    %v278 = vmul.f32 %v243, %v277
    %v279 = vlaneseq
    %v280 = vshrl.u32 %v279, 7
    %v281 = vsub.s32 3, %v280
    %v282 = vrot.slane %v273, %v281
    %v283 = vadd.f32 %v278, %v282
    %v284 = vadd.f32 %v41, %v283
    %285 = vst.msk [vmem:[#allocation7] sm:$0xff] %vm51, %v284
    // Predicated region
    $region22: #{tpu_custom_call.1} parent=1 // pred_check
      _
    $region23: #{tpu_custom_call.1} parent=1 // pred_check_branch
      %287 = sbr.rel (0) target = $region25
    $region24: #{tpu_custom_call.1} parent=1 // pred_region
      %s289 = ssub.s32 128, 128
      %290 = vsyncadd [#allocation4], %s289
      %s292 = sshll.u32 [#allocation7], 4
      %s293 = int_to_ptr.vmem [resolvable:$true] %s292
      %295 = dma.vmem_to_hbm [thread:$0]  %s293, 128, %s3, [#allocation4]
    $region25: #{tpu_custom_call.1} parent=1 // pred_fallthru
      _
    // Predicated region
    $region26: #{tpu_custom_call.1} parent=1 // pred_check
      _
    $region27: #{tpu_custom_call.1} parent=1 // pred_check_branch
      %297 = sbr.rel (0) target = $region29
    $region28: #{tpu_custom_call.1} parent=1 // pred_region
      %298 = dma.done [#allocation4], 128
    $region29: #{tpu_custom_call.1} parent=1 // pred_fallthru
      _
    %299 = vsyncpa [#allocation3], 1
    %300 = vsyncpa [#allocation6], 1
    %301 = vsyncpa [#allocation4], 1

</llo_original>
